<compile_context>
chip_gen: v7x
topology: tpu7x:2x2x1
jax: 0.10.0
libtpu: 0.0.40
codegen_flags: <defaults>
</compile_context>

<pallas_src>
import math

import jax
import jax.numpy as jnp
from jax import lax
from jax.experimental import pallas as pl
from jax.experimental.pallas import tpu as pltpu

_LANE = 128
_VMEM_DATA_BUDGET = 24 * 1024 * 1024   # per-step data footprint target
_V_RESIDENT_BYTES = 8 * 1024 * 1024    # keep V as one resident block up to this


# ---------------- Pallas kernels ----------------
def _value_kernel_single_k(x_ref, vt_ref, o_ref):
    # o[L, tm] = Vt @ X^T.  Vt (tiny, pre-transposed in the wrapper) is the
    # MXU-natural LHS; only the X tile needs an internal relayout, and only
    # once per output tile (single reduction step -> no accumulator, no
    # init/finalize phases).
    o_ref[...] = lax.dot_general(
        vt_ref[...], x_ref[...],
        dimension_numbers=(((1,), (1,)), ((), ())),
        preferred_element_type=jnp.float32,
    ).astype(o_ref.dtype)


def _value_kernel_acc(x_ref, v_ref, o_ref, acc_ref):
    # Tiled-K path (only for very large latdim).  Accumulate the MXU-natural
    # product x @ v ([tm, L]); transpose the accumulator ONCE at the last K
    # step instead of transposing the big X tile every step.
    k = pl.program_id(1)

    @pl.when(k == 0)
    def _():
        acc_ref[...] = jnp.zeros_like(acc_ref)

    acc_ref[...] += jnp.dot(x_ref[...], v_ref[...],
                            preferred_element_type=jnp.float32)

    @pl.when(k == pl.num_programs(1) - 1)
    def _():
        o_ref[...] = acc_ref[...].T.astype(o_ref.dtype)


# ---------------- tiling helpers ----------------
def _pick_tm(N, preferred):
    """N-axis tile (output lane axis).  Multiple of 128 whenever N allows,
    capped so the grid keeps >= 2 (preferably an even number of) blocks so
    v7x's two TensorCores can split the 'parallel' N axis; large ragged N
    gets a lane-aligned tile + cdiv grid instead of a whole-array block."""
    if N < 2 * _LANE:
        return N                                    # tiny: full-extent block is legal
    cap = max(_LANE, (min(preferred, N) // _LANE) * _LANE)
    if N % _LANE == 0:
        best_multi = best_any = None
        t = cap
        while t >= _LANE:
            if N % t == 0:
                nblk = N // t
                best_any = best_any or t
                if nblk >= 2:
                    best_multi = best_multi or t
                    if nblk % 2 == 0:
                        return t                    # largest tile, even block count
            t -= _LANE
        return best_multi or best_any or _LANE
    # Ragged N: lane-aligned tile, cdiv grid (masked last block), >= 2 blocks.
    return min(cap, max(_LANE, (pl.cdiv(N, 2) // _LANE) * _LANE))


def _footprint_bytes(tm, kb, L, in_bytes, out_bytes, x_buffers, with_acc):
    return (x_buffers * tm * kb * in_bytes          # X tiles (multi-buffered)
            + 2 * kb * L * in_bytes                 # V block(s)
            + 2 * L * tm * out_bytes                # output tiles
            + (tm * L * 4 if with_acc else 0))      # f32 accumulator scratch


# ---------------- pallas_call wrapper: out[L, N] = (x @ v).T ----------------
def pallas_value_matmul(x, v, *, out_dtype=None, tm=None, x_buffers=2,
                        vmem_limit_bytes=None):
    """Returns out[L, N] = (x @ v).T for x: [N, K], v: [K, L]."""
    N, K = x.shape
    K2, L = v.shape
    assert K == K2, (x.shape, v.shape)
    out_dtype = x.dtype if out_dtype is None else out_dtype
    in_bytes = jnp.dtype(x.dtype).itemsize
    out_bytes = jnp.dtype(out_dtype).itemsize

    # V resident as a single block whenever it is small (4 KiB at latdim=32);
    # the tiled-K accumulator path only exists for huge latdim.
    single_k = (2 * K * L * in_bytes) <= _V_RESIDENT_BYTES
    if single_k:
        tk = K
    else:
        tk = None
        t = max(_LANE, (min(512, K) // _LANE) * _LANE)
        while t >= _LANE:
            if K % t == 0:
                tk = t
                break
            t -= _LANE
        assert tk is not None, f"tiled-K path needs a 128-multiple divisor of K={K}"

    if tm is None:
        tm = _pick_tm(N, 4096)                      # review: 2048-8192 preferred
        while tm > _LANE and _footprint_bytes(
                tm, tk, L, in_bytes, out_bytes, x_buffers,
                not single_k) > _VMEM_DATA_BUDGET:
            tm = max(_LANE, ((tm // 2) // _LANE) * _LANE)

    need = _footprint_bytes(tm, tk, L, in_bytes, out_bytes, x_buffers, not single_k)
    if vmem_limit_bytes is None:
        # Explicit limit: raises v5e's 16 MiB scoped default, stays safely
        # under v7x's 64 MiB physical VMEM.
        vmem_limit_bytes = int(min(48 * 2**20, max(32 * 2**20, need + 4 * 2**20)))

    grid_n = pl.cdiv(N, tm)                         # ragged last block is masked
    x_pipe = {} if x_buffers == 2 else {"pipeline_mode": pl.Buffered(x_buffers)}

    if single_k:
        v_in = v.T                                  # tiny [L, K]; keeps MXU LHS natural
        grid = (grid_n,)
        in_specs = [
            pl.BlockSpec((tm, K), lambda i: (i, 0), **x_pipe),   # nodeEmbed tile
            pl.BlockSpec((L, K), lambda i: (0, 0)),              # Vt, fully resident
        ]
        out_spec = pl.BlockSpec((L, tm), lambda i: (0, i))
        scratch = []
        kernel = _value_kernel_single_k
        dims = ("parallel",)
    else:
        v_in = v
        grid = (grid_n, K // tk)                    # reduction axis last
        in_specs = [
            pl.BlockSpec((tm, tk), lambda i, k: (i, k), **x_pipe),
            pl.BlockSpec((tk, L), lambda i, k: (k, 0)),
        ]
        out_spec = pl.BlockSpec((L, tm), lambda i, k: (0, i))
        scratch = [pltpu.VMEM((tm, L), jnp.float32)]
        kernel = _value_kernel_acc
        dims = ("parallel", "arbitrary")

    return pl.pallas_call(
        kernel,
        out_shape=jax.ShapeDtypeStruct((L, N), out_dtype),
        grid_spec=pltpu.PrefetchScalarGridSpec(
            num_scalar_prefetch=0,
            grid=grid,
            in_specs=in_specs,
            out_specs=out_spec,
            scratch_shapes=scratch,
        ),
        compiler_params=pltpu.CompilerParams(
            dimension_semantics=dims,
            vmem_limit_bytes=vmem_limit_bytes,
        ),
    )(x, v_in)


# ---------------- prepareValue forward ----------------
def prepare_value(node_embed, V, *, att_head, out_dtype=None,
                  min_nodes_for_pallas=4096, force_pallas=False,
                  **kernel_kwargs):
    """value[H, latdim//H, N] == permute(reshape(nodeEmbed @ V, [N, H, D]), [1,2,0])."""
    N, latdim = node_embed.shape
    assert V.shape == (latdim, latdim), (V.shape, latdim)
    assert latdim % att_head == 0
    head_dim = latdim // att_head
    out_dtype = node_embed.dtype if out_dtype is None else out_dtype

    # Cast only the tiny weight to the activation dtype.  Never cast
    # nodeEmbed here: a wrapper-side cast is an extra full-HBM pass that costs
    # more than the in-kernel DMA bytes it would save.  Callers that already
    # hold bf16 activations get the bf16 MXU feed automatically.
    if V.dtype != node_embed.dtype:
        V = V.astype(node_embed.dtype)

    if not force_pallas and N < min_nodes_for_pallas:
        # Tiny op: pallas_call fixed overhead exceeds the fused XLA cost.
        out_t = (node_embed @ V).T.astype(out_dtype)
    else:
        # Kernel emits [latdim, N]; the PyTorch reshape + permute([1,2,0]) is
        # then a free leading-axis reshape:
        #   value[h, d, n] = (nodeEmbed @ V)[n, h*head_dim + d]
        out_t = pallas_value_matmul(node_embed, V, out_dtype=out_dtype,
                                    **kernel_kwargs)
    return out_t.reshape(att_head, head_dim, N)


def xavier_uniform(key, shape, dtype=jnp.float32):
    fan_in, fan_out = shape[0], shape[1]
    bound = math.sqrt(6.0 / (fan_in + fan_out))
    return jax.random.uniform(key, shape, dtype=dtype, minval=-bound, maxval=bound)


if __name__ == "__main__":
    # args.latdim = 32, args.att_head = 4
    latdim = 32
    att_head = 4
    head_dim = latdim // att_head

    key = jax.random.PRNGKey(0)
    k_x0, k_v, k_x1, k_x2 = jax.random.split(key, 4)
    V = xavier_uniform(k_v, (latdim, latdim))

    def ref_value(x, w):
        return jnp.transpose((x @ w).reshape(x.shape[0], att_head, head_dim), (1, 2, 0))

    # 1) Module-scale shapes (N=64): dispatcher routes to plain XLA
    #    (the whole op is ~20 KiB; a pallas_call would be pure overhead).
    x_small = jax.random.normal(k_x0, (64, latdim), dtype=jnp.float32)
    out_small = jax.block_until_ready(prepare_value(x_small, V, att_head=att_head))
    assert out_small.shape == (att_head, head_dim, 64)
    assert jnp.allclose(out_small, ref_value(x_small, V), atol=1e-5, rtol=1e-5)

    # 2) Pallas kernel path (forced), lane-aligned N -> tm=1024, grid of 2
    #    'parallel' blocks (both v7x TensorCores busy).
    N = 2048
    x = jax.random.normal(k_x1, (N, latdim), dtype=jnp.float32)
    out = jax.block_until_ready(
        prepare_value(x, V, att_head=att_head, force_pallas=True))
    assert out.shape == (att_head, head_dim, N)
    assert jnp.allclose(out, ref_value(x, V), atol=1e-5, rtol=1e-5)

    # 3) Pallas kernel path with ragged (non-128-divisible) N: lane-aligned
    #    tile + cdiv grid, masked last block (no whole-array fallback).
    N_rag = 2100
    x_rag = jax.random.normal(k_x2, (N_rag, latdim), dtype=jnp.float32)
    out_rag = jax.block_until_ready(
        prepare_value(x_rag, V, att_head=att_head, force_pallas=True))
    assert out_rag.shape == (att_head, head_dim, N_rag)
    assert jnp.allclose(out_rag, ref_value(x_rag, V), atol=1e-5, rtol=1e-5)

    # 4) Caller already holds bf16 activations + bf16 consumer downstream:
    #    bf16 MXU feed (f32 accumulate) and bf16 writeback, no wrapper cast
    #    of the activation tensor.
    x_bf16 = x.astype(jnp.bfloat16)   # simulates an upstream bf16 producer
    out_bf16 = jax.block_until_ready(
        prepare_value(x_bf16, V, att_head=att_head, out_dtype=jnp.bfloat16,
                      force_pallas=True))
    ref_bf = ref_value(x_bf16.astype(jnp.float32),
                       V.astype(jnp.bfloat16).astype(jnp.float32))
    assert out_bf16.shape == ref_bf.shape
    assert jnp.allclose(out_bf16.astype(jnp.float32), ref_bf, atol=5e-2, rtol=5e-2)

    print("KERNEL_OK")
</pallas_src>

<mosaic_0001>
module attributes {stable_mosaic.version = 11 : i64} {
  func.func @_value_kernel_single_k(%arg0: i32, %arg1: memref<1024x32xf32, #tpu.memory_space<vmem>>, %arg2: memref<32x32xf32, #tpu.memory_space<vmem>>, %arg3: memref<32x1024xf32, #tpu.memory_space<vmem>>) attributes {dimension_semantics = [#tpu.dimension_semantics<parallel>], iteration_bounds = array<i64: 2>, scalar_prefetch = 0 : i64, scratch_operands = 0 : i64, tpu.core_type = #tpu.core_type<tc>, window_params = [{transform_indices = @transform_0, window_bounds = array<i64: 1024, 32>}, {pipeline_mode = #tpu.pipeline_mode<synchronous>, transform_indices = @transform_1, window_bounds = array<i64: 32, 32>}, {transform_indices = @transform_2, window_bounds = array<i64: 32, 1024>}]} {
    %c0 = arith.constant 0 : index
    %c0_0 = arith.constant 0 : index
    %0 = vector.load %arg2[%c0, %c0_0] : memref<32x32xf32, #tpu.memory_space<vmem>>, vector<32x32xf32>
    %c0_1 = arith.constant 0 : index
    %c0_2 = arith.constant 0 : index
    %1 = vector.load %arg1[%c0_1, %c0_2] : memref<1024x32xf32, #tpu.memory_space<vmem>>, vector<1024x32xf32>
    %cst = arith.constant dense<0.000000e+00> : vector<32x1024xf32>
    %2 = tpu.matmul %0, %1, %cst {dimension_numbers = #tpu.dot_dimension_numbers<[1], [1], [0], [0], [0, 0, 1, 0], [], []>} : vector<32x32xf32>, vector<1024x32xf32>, vector<32x1024xf32> -> vector<32x1024xf32>
    %c0_3 = arith.constant 0 : index
    %c0_4 = arith.constant 0 : index
    %3 = vector.load %arg3[%c0_3, %c0_4] : memref<32x1024xf32, #tpu.memory_space<vmem>>, vector<32x1024xf32>
    tpu.vector_store %arg3[%c0_3, %c0_4], %2 {strides = array<i32>} : memref<32x1024xf32, #tpu.memory_space<vmem>>, vector<32x1024xf32>,
    return
  }
  func.func @transform_0(%arg0: i32) -> (i32, i32) {
    %c0_i32 = arith.constant 0 : i32
    %c0_i32_0 = arith.constant 0 : i32
    return %arg0, %c0_i32 : i32, i32
  }
  func.func @transform_1(%arg0: i32) -> (i32, i32) {
    %c0_i32 = arith.constant 0 : i32
    %c0_i32_0 = arith.constant 0 : i32
    %c0_i32_1 = arith.constant 0 : i32
    return %c0_i32, %c0_i32_0 : i32, i32
  }
  func.func @transform_2(%arg0: i32) -> (i32, i32) {
    %c0_i32 = arith.constant 0 : i32
    %c0_i32_0 = arith.constant 0 : i32
    return %c0_i32, %arg0 : i32, i32
  }
}

</mosaic_0001>

<llo_original>
// kernel: tpu_custom_call.1
$region0: #{tpu_custom_call.1}
  #allocation0 [shape = 'u32[]', space=smem, size = 0x4, offset = 0x4, fixed_abs, tag = 'smem constant byte address 0x4 - core index']
  #allocation1 [shape = 'u32[144,128]{1,0:T(1,128)}', space=vmem, size = 0x12000, scoped, tag = 'internal scratch']
  %s0 = inlined_call_operand.vmem [shape: f32[2048,32], index: 0, kind: input, shape index: {}]
  %s1 = inlined_call_operand.vmem [shape: f32[32,32], index: 1, kind: input, shape index: {}]
  %s2 = inlined_call_operand.hbm [shape: f32[32,2048], index: 2, kind: output, shape index: {}]
  %s3 = sld [smem:[#allocation0]]
  $region41: #{tpu_custom_call.1} parent=0
    _
  %s5 = ssub.s32 1, %s3
  %s6 = scalar_select 0, %s5, %s3
  $region1: #{tpu_custom_call.1} parent=0
    #allocation2 [shape = 'u8[262144]{0}', space=vmem, size = 0x40000, scoped, tag = 'output window, operand 0']
    #allocation3 [shape = 's32[2]{0}', space=sflag, size = 0x8, scoped, tag = 'scoped memory for tpu_custom_call.1']
    %7 = vsyncpa [#allocation3], 0
    %s8 = scalar_lea.sflag [#allocation3], 1
    %9 = vsyncpa %s8, 0
    loop: start=0, step=1, limit=4
    $region2: #{tpu_custom_call.1} parent=1 // loop_pre_header
      _
    $region3: #{tpu_custom_call.1} parent=1 // loop_header
      %s11 = sphi 0, %s15
      %p12 = scmp.ge.s32.totalorder %s11, 4
      %s21 = sphi 0, %s23
      %s24 = sphi 0, %s21
      %s25 = sphi 0, %s24
      %s41 = sphi 0, %s25
      %s45 = sphi 0, %s45
      %s47 = sphi 0, %s45
      %s48 = sphi 0, %s47
      %s62 = sphi 0, %s48
      %s68 = sphi 0, %s70
      %s71 = sphi 0, %s68
      %s72 = sphi 0, %s71
      %s88 = sphi 0, %s72
    $region4: #{tpu_custom_call.1} parent=1 // loop_header_branch
      %14 = sbr.rel (%p12) target = $region8
    $region5: #{tpu_custom_call.1} parent=1 // loop_body
      %s16 = ssub.s32 %s11, 1
      %s17 = ssub.s32 %s11, 2
      %s18 = sadd.s32 %s11, 1
      %s19 = ssub.s32 %s11, %s18
      %p20 = scmp.eq.s32.totalorder %s19, 0
      %s22 = sadd.s32 %s21, 1
      %s23 = scalar_select %p20, %s21, %s22
      %p26 = pneg %p20
      %p27 = scmp.eq.s32.totalorder %s11, 1
      %p28 = por %p26, %p27
      %p29 = scmp.ne.s32.totalorder %s21, %s24
      %p30 = scmp.eq.s32.totalorder %s11, 0
      %p31 = por %p29, %p30
      %p32 = scmp.ne.s32.totalorder %s21, %s24
      %p33 = scmp.eq.s32.totalorder %s16, 1
      %p34 = por %p32, %p33
      %p35 = scmp.ne.s32.totalorder %s24, %s25
      %p36 = scmp.eq.s32.totalorder %s16, 0
      %p37 = por %p35, %p36
      %p38 = scmp.ne.s32.totalorder %s24, %s25
      %p39 = scmp.eq.s32.totalorder %s17, 1
      %p40 = por %p38, %p39
      %p42 = scmp.ne.s32.totalorder %s25, %s41
      %p43 = scmp.eq.s32.totalorder %s17, 0
      %p44 = por %p42, %p43
      %s46 = sadd.s32 %s45, 1
      %p49 = scmp.eq.s32.totalorder %s11, 1
      %p50 = scmp.ne.s32.totalorder %s45, %s47
      %p51 = scmp.eq.s32.totalorder %s11, 0
      %p52 = por %p50, %p51
      %p53 = scmp.ne.s32.totalorder %s45, %s47
      %p54 = scmp.eq.s32.totalorder %s16, 1
      %p55 = por %p53, %p54
      %p56 = scmp.ne.s32.totalorder %s47, %s48
      %p57 = scmp.eq.s32.totalorder %s16, 0
      %p58 = por %p56, %p57
      %p59 = scmp.ne.s32.totalorder %s47, %s48
      %p60 = scmp.eq.s32.totalorder %s17, 1
      %p61 = por %p59, %p60
      %p63 = scmp.ne.s32.totalorder %s48, %s62
      %p64 = scmp.eq.s32.totalorder %s17, 0
      %p65 = por %p63, %p64
      %s66 = ssub.s32 %s11, %s18
      %p67 = scmp.eq.s32.totalorder %s66, 0
      %s69 = sadd.s32 %s68, 1
      %s70 = scalar_select %p67, %s68, %s69
      %p73 = pneg %p67
      %p74 = scmp.eq.s32.totalorder %s11, 1
      %p75 = por %p73, %p74
      %p76 = scmp.ne.s32.totalorder %s68, %s71
      %p77 = scmp.eq.s32.totalorder %s11, 0
      %p78 = por %p76, %p77
      %p79 = scmp.ne.s32.totalorder %s68, %s71
      %p80 = scmp.eq.s32.totalorder %s16, 1
      %p81 = por %p79, %p80
      %p82 = scmp.ne.s32.totalorder %s71, %s72
      %p83 = scmp.eq.s32.totalorder %s16, 0
      %p84 = por %p82, %p83
      %p85 = scmp.ne.s32.totalorder %s71, %s72
      %p86 = scmp.eq.s32.totalorder %s17, 1
      %p87 = por %p85, %p86
      %p89 = scmp.ne.s32.totalorder %s72, %s88
      %p90 = scmp.eq.s32.totalorder %s17, 0
      %p91 = por %p89, %p90
      %p92 = scmp.le.s32.totalorder 1, %s11
      %p93 = scmp.lt.s32.totalorder %s11, 3
      %p94 = pnand %p92, %p93
      %p95 = pneg %p94
      // Predicated region
      $region9: #{tpu_custom_call.1} parent=5 // pred_check
        _
      $region10: #{tpu_custom_call.1} parent=5 // pred_check_branch
        %97 = sbr.rel (%p94) target = $region12
      $region11: #{tpu_custom_call.1} parent=5 // pred_region
        %s98 = ssub.s32 %s11, 1
        // Predicated region
        $region13: #{tpu_custom_call.1} parent=11 // pred_check
          %p99 = pneg %p58
        $region14: #{tpu_custom_call.1} parent=11 // pred_check_branch
          %101 = sbr.rel (%p99) target = $region16
        $region15: #{tpu_custom_call.1} parent=11 // pred_region
          _
        $region16: #{tpu_custom_call.1} parent=11 // pred_fallthru
          _
      $region12: #{tpu_custom_call.1} parent=5 // pred_fallthru
        _
      %p102 = scmp.lt.s32.totalorder %s11, 2
      // Predicated region
      $region17: #{tpu_custom_call.1} parent=5 // pred_check
        %p103 = pneg %p102
      $region18: #{tpu_custom_call.1} parent=5 // pred_check_branch
        %105 = sbr.rel (%p103) target = $region20
      $region19: #{tpu_custom_call.1} parent=5 // pred_region
        // Predicated region
        $region21: #{tpu_custom_call.1} parent=19 // pred_check
          %p106 = pneg %p31
        $region22: #{tpu_custom_call.1} parent=19 // pred_check_branch
          %108 = sbr.rel (%p106) target = $region24
        $region23: #{tpu_custom_call.1} parent=19 // pred_region
          %s109 = smul.u32 128, %s11
          %p110 = scmp.lt.s32.totalorder %s109, 255
          %s111 = scalar_select %p110, %s109, 255
          %s112 = smul.addr %s111, 8
          %s113 = scalar_lea.vmem %s0, %s112
          %s114 = smul.u32 128, %s11
        $region24: #{tpu_custom_call.1} parent=19 // pred_fallthru
          _
      $region20: #{tpu_custom_call.1} parent=5 // pred_fallthru
        _
      %p115 = scmp.le.s32.totalorder 1, %s11
      %p116 = scmp.lt.s32.totalorder %s11, 3
      %p117 = pnand %p115, %p116
      %p118 = pneg %p117
      // Predicated region
      $region25: #{tpu_custom_call.1} parent=5 // pred_check
        _
      $region26: #{tpu_custom_call.1} parent=5 // pred_check_branch
        %120 = sbr.rel (%p117) target = $region28
      $region27: #{tpu_custom_call.1} parent=5 // pred_region
        %s121 = ssub.s32 %s11, 1
        %s122 = smul.u32 128, %s16
        %p123 = scmp.lt.s32.totalorder %s122, 255
        %s124 = scalar_select %p123, %s122, 255
        %s125 = smul.addr %s124, 8
        %s126 = scalar_lea.vmem %s0, %s125
        %p127 = pneg %p37
        %p128 = pneg %p34
        %p129 = pneg %p58
        %p130 = pneg %p55
        %p131 = pneg %p84
        %p132 = pneg %p81
        %s133 = sand.u32 %s71, 1
        %s134 = scalar_lea.sflag [#allocation3], %s133
        %s135 = sand.u32 %s71, 1
        %s136 = smul.addr %s135, 256
        %s137 = scalar_lea.vmem [#allocation2], %s136
        %s138 = smul.u32 128, %s16
        %p139 = scmp.lt.s32.totalorder %s138, 255
        %s140 = scalar_select %p139, %s138, 255
        %s141 = smul.addr %s140, 8
        %s142 = scalar_lea.vmem %s0, %s141
        %s143 = smul.u32 128, %s16
        %s144 = smul.u32 8, %s16
        %v145 = vld [vmem:[%s1] sm:$0xff]
        %v146 = vld [vmem:[%s1 + $0x8] sm:$0xff]
        %v147 = vld [vmem:[%s1 + $0x10] sm:$0xff]
        %v148 = vld [vmem:[%s1 + $0x18] sm:$0xff]
        %v149 = vld [vmem:[%s142] sm:$0xff]
        %v150 = vld [vmem:[%s142 + $0x8] sm:$0xff]
        %v151 = vld [vmem:[%s142 + $0x10] sm:$0xff]
        %v152 = vld [vmem:[%s142 + $0x18] sm:$0xff]
        %v153 = vld [vmem:[%s142 + $0x20] sm:$0xff]
        %v154 = vld [vmem:[%s142 + $0x28] sm:$0xff]
        %v155 = vld [vmem:[%s142 + $0x30] sm:$0xff]
        %v156 = vld [vmem:[%s142 + $0x38] sm:$0xff]
        %v157 = vld [vmem:[%s142 + $0x40] sm:$0xff]
        %v158 = vld [vmem:[%s142 + $0x48] sm:$0xff]
        %v159 = vld [vmem:[%s142 + $0x50] sm:$0xff]
        %v160 = vld [vmem:[%s142 + $0x58] sm:$0xff]
        %v161 = vld [vmem:[%s142 + $0x60] sm:$0xff]
        %v162 = vld [vmem:[%s142 + $0x68] sm:$0xff]
        %v163 = vld [vmem:[%s142 + $0x70] sm:$0xff]
        %v164 = vld [vmem:[%s142 + $0x78] sm:$0xff]
        %v165 = vld [vmem:[%s142 + $0x80] sm:$0xff]
        %v166 = vld [vmem:[%s142 + $0x88] sm:$0xff]
        %v167 = vld [vmem:[%s142 + $0x90] sm:$0xff]
        %v168 = vld [vmem:[%s142 + $0x98] sm:$0xff]
        %v169 = vld [vmem:[%s142 + $0xa0] sm:$0xff]
        %v170 = vld [vmem:[%s142 + $0xa8] sm:$0xff]
        %v171 = vld [vmem:[%s142 + $0xb0] sm:$0xff]
        %v172 = vld [vmem:[%s142 + $0xb8] sm:$0xff]
        %v173 = vld [vmem:[%s142 + $0xc0] sm:$0xff]
        %v174 = vld [vmem:[%s142 + $0xc8] sm:$0xff]
        %v175 = vld [vmem:[%s142 + $0xd0] sm:$0xff]
        %v176 = vld [vmem:[%s142 + $0xd8] sm:$0xff]
        %v177 = vld [vmem:[%s142 + $0xe0] sm:$0xff]
        %v178 = vld [vmem:[%s142 + $0xe8] sm:$0xff]
        %v179 = vld [vmem:[%s142 + $0xf0] sm:$0xff]
        %v180 = vld [vmem:[%s142 + $0xf8] sm:$0xff]
        %v181 = vld [vmem:[%s142 + $0x100] sm:$0xff]
        %v182 = vld [vmem:[%s142 + $0x108] sm:$0xff]
        %v183 = vld [vmem:[%s142 + $0x110] sm:$0xff]
        %v184 = vld [vmem:[%s142 + $0x118] sm:$0xff]
        %v185 = vld [vmem:[%s142 + $0x120] sm:$0xff]
        %v186 = vld [vmem:[%s142 + $0x128] sm:$0xff]
        %v187 = vld [vmem:[%s142 + $0x130] sm:$0xff]
        %v188 = vld [vmem:[%s142 + $0x138] sm:$0xff]
        %v189 = vld [vmem:[%s142 + $0x140] sm:$0xff]
        %v190 = vld [vmem:[%s142 + $0x148] sm:$0xff]
        %v191 = vld [vmem:[%s142 + $0x150] sm:$0xff]
        %v192 = vld [vmem:[%s142 + $0x158] sm:$0xff]
        %v193 = vld [vmem:[%s142 + $0x160] sm:$0xff]
        %v194 = vld [vmem:[%s142 + $0x168] sm:$0xff]
        %v195 = vld [vmem:[%s142 + $0x170] sm:$0xff]
        %v196 = vld [vmem:[%s142 + $0x178] sm:$0xff]
        %v197 = vld [vmem:[%s142 + $0x180] sm:$0xff]
        %v198 = vld [vmem:[%s142 + $0x188] sm:$0xff]
        %v199 = vld [vmem:[%s142 + $0x190] sm:$0xff]
        %v200 = vld [vmem:[%s142 + $0x198] sm:$0xff]
        %v201 = vld [vmem:[%s142 + $0x1a0] sm:$0xff]
        %v202 = vld [vmem:[%s142 + $0x1a8] sm:$0xff]
        %v203 = vld [vmem:[%s142 + $0x1b0] sm:$0xff]
        %v204 = vld [vmem:[%s142 + $0x1b8] sm:$0xff]
        %v205 = vld [vmem:[%s142 + $0x1c0] sm:$0xff]
        %v206 = vld [vmem:[%s142 + $0x1c8] sm:$0xff]
        %v207 = vld [vmem:[%s142 + $0x1d0] sm:$0xff]
        %v208 = vld [vmem:[%s142 + $0x1d8] sm:$0xff]
        %v209 = vld [vmem:[%s142 + $0x1e0] sm:$0xff]
        %v210 = vld [vmem:[%s142 + $0x1e8] sm:$0xff]
        %v211 = vld [vmem:[%s142 + $0x1f0] sm:$0xff]
        %v212 = vld [vmem:[%s142 + $0x1f8] sm:$0xff]
        %v213 = vld [vmem:[%s142 + $0x200] sm:$0xff]
        %v214 = vld [vmem:[%s142 + $0x208] sm:$0xff]
        %v215 = vld [vmem:[%s142 + $0x210] sm:$0xff]
        %v216 = vld [vmem:[%s142 + $0x218] sm:$0xff]
        %v217 = vld [vmem:[%s142 + $0x220] sm:$0xff]
        %v218 = vld [vmem:[%s142 + $0x228] sm:$0xff]
        %v219 = vld [vmem:[%s142 + $0x230] sm:$0xff]
        %v220 = vld [vmem:[%s142 + $0x238] sm:$0xff]
        %v221 = vld [vmem:[%s142 + $0x240] sm:$0xff]
        %v222 = vld [vmem:[%s142 + $0x248] sm:$0xff]
        %v223 = vld [vmem:[%s142 + $0x250] sm:$0xff]
        %v224 = vld [vmem:[%s142 + $0x258] sm:$0xff]
        %v225 = vld [vmem:[%s142 + $0x260] sm:$0xff]
        %v226 = vld [vmem:[%s142 + $0x268] sm:$0xff]
        %v227 = vld [vmem:[%s142 + $0x270] sm:$0xff]
        %v228 = vld [vmem:[%s142 + $0x278] sm:$0xff]
        %v229 = vld [vmem:[%s142 + $0x280] sm:$0xff]
        %v230 = vld [vmem:[%s142 + $0x288] sm:$0xff]
        %v231 = vld [vmem:[%s142 + $0x290] sm:$0xff]
        %v232 = vld [vmem:[%s142 + $0x298] sm:$0xff]
        %v233 = vld [vmem:[%s142 + $0x2a0] sm:$0xff]
        %v234 = vld [vmem:[%s142 + $0x2a8] sm:$0xff]
        %v235 = vld [vmem:[%s142 + $0x2b0] sm:$0xff]
        %v236 = vld [vmem:[%s142 + $0x2b8] sm:$0xff]
        %v237 = vld [vmem:[%s142 + $0x2c0] sm:$0xff]
        %v238 = vld [vmem:[%s142 + $0x2c8] sm:$0xff]
        %v239 = vld [vmem:[%s142 + $0x2d0] sm:$0xff]
        %v240 = vld [vmem:[%s142 + $0x2d8] sm:$0xff]
        %v241 = vld [vmem:[%s142 + $0x2e0] sm:$0xff]
        %v242 = vld [vmem:[%s142 + $0x2e8] sm:$0xff]
        %v243 = vld [vmem:[%s142 + $0x2f0] sm:$0xff]
        %v244 = vld [vmem:[%s142 + $0x2f8] sm:$0xff]
        %v245 = vld [vmem:[%s142 + $0x300] sm:$0xff]
        %v246 = vld [vmem:[%s142 + $0x308] sm:$0xff]
        %v247 = vld [vmem:[%s142 + $0x310] sm:$0xff]
        %v248 = vld [vmem:[%s142 + $0x318] sm:$0xff]
        %v249 = vld [vmem:[%s142 + $0x320] sm:$0xff]
        %v250 = vld [vmem:[%s142 + $0x328] sm:$0xff]
        %v251 = vld [vmem:[%s142 + $0x330] sm:$0xff]
        %v252 = vld [vmem:[%s142 + $0x338] sm:$0xff]
        %v253 = vld [vmem:[%s142 + $0x340] sm:$0xff]
        %v254 = vld [vmem:[%s142 + $0x348] sm:$0xff]
        %v255 = vld [vmem:[%s142 + $0x350] sm:$0xff]
        %v256 = vld [vmem:[%s142 + $0x358] sm:$0xff]
        %v257 = vld [vmem:[%s142 + $0x360] sm:$0xff]
        %v258 = vld [vmem:[%s142 + $0x368] sm:$0xff]
        %v259 = vld [vmem:[%s142 + $0x370] sm:$0xff]
        %v260 = vld [vmem:[%s142 + $0x378] sm:$0xff]
        %v261 = vld [vmem:[%s142 + $0x380] sm:$0xff]
        %v262 = vld [vmem:[%s142 + $0x388] sm:$0xff]
        %v263 = vld [vmem:[%s142 + $0x390] sm:$0xff]
        %v264 = vld [vmem:[%s142 + $0x398] sm:$0xff]
        %v265 = vld [vmem:[%s142 + $0x3a0] sm:$0xff]
        %v266 = vld [vmem:[%s142 + $0x3a8] sm:$0xff]
        %v267 = vld [vmem:[%s142 + $0x3b0] sm:$0xff]
        %v268 = vld [vmem:[%s142 + $0x3b8] sm:$0xff]
        %v269 = vld [vmem:[%s142 + $0x3c0] sm:$0xff]
        %v270 = vld [vmem:[%s142 + $0x3c8] sm:$0xff]
        %v271 = vld [vmem:[%s142 + $0x3d0] sm:$0xff]
        %v272 = vld [vmem:[%s142 + $0x3d8] sm:$0xff]
        %v273 = vld [vmem:[%s142 + $0x3e0] sm:$0xff]
        %v274 = vld [vmem:[%s142 + $0x3e8] sm:$0xff]
        %v275 = vld [vmem:[%s142 + $0x3f0] sm:$0xff]
        %v276 = vld [vmem:[%s142 + $0x3f8] sm:$0xff]
        %vm277 = vcmask 261120
        %v279 = vsel %vm277, %v145, 0
        %v282 = vsel %vm277, %v146, 0
        %v285 = vsel %vm277, %v147, 0
        %v288 = vsel %vm277, %v148, 0
        %v291 = vsel %vm277, %v149, 0
        %v294 = vsel %vm277, %v150, 0
        %v297 = vsel %vm277, %v151, 0
        %v300 = vsel %vm277, %v152, 0
        %v303 = vsel %vm277, %v153, 0
        %v306 = vsel %vm277, %v154, 0
        %v309 = vsel %vm277, %v155, 0
        %v312 = vsel %vm277, %v156, 0
        %v315 = vsel %vm277, %v157, 0
        %v318 = vsel %vm277, %v158, 0
        %v321 = vsel %vm277, %v159, 0
        %v324 = vsel %vm277, %v160, 0
        %v327 = vsel %vm277, %v161, 0
        %v330 = vsel %vm277, %v162, 0
        %v333 = vsel %vm277, %v163, 0
        %v336 = vsel %vm277, %v164, 0
        %v339 = vsel %vm277, %v165, 0
        %v342 = vsel %vm277, %v166, 0
        %v345 = vsel %vm277, %v167, 0
        %v348 = vsel %vm277, %v168, 0
        %v351 = vsel %vm277, %v169, 0
        %v354 = vsel %vm277, %v170, 0
        %v357 = vsel %vm277, %v171, 0
        %v360 = vsel %vm277, %v172, 0
        %v363 = vsel %vm277, %v173, 0
        %v366 = vsel %vm277, %v174, 0
        %v369 = vsel %vm277, %v175, 0
        %v372 = vsel %vm277, %v176, 0
        %v375 = vsel %vm277, %v177, 0
        %v378 = vsel %vm277, %v178, 0
        %v381 = vsel %vm277, %v179, 0
        %v384 = vsel %vm277, %v180, 0
        %v387 = vsel %vm277, %v181, 0
        %v390 = vsel %vm277, %v182, 0
        %v393 = vsel %vm277, %v183, 0
        %v396 = vsel %vm277, %v184, 0
        %v399 = vsel %vm277, %v185, 0
        %v402 = vsel %vm277, %v186, 0
        %v405 = vsel %vm277, %v187, 0
        %v408 = vsel %vm277, %v188, 0
        %v411 = vsel %vm277, %v189, 0
        %v414 = vsel %vm277, %v190, 0
        %v417 = vsel %vm277, %v191, 0
        %v420 = vsel %vm277, %v192, 0
        %v423 = vsel %vm277, %v193, 0
        %v426 = vsel %vm277, %v194, 0
        %v429 = vsel %vm277, %v195, 0
        %v432 = vsel %vm277, %v196, 0
        %v435 = vsel %vm277, %v197, 0
        %v438 = vsel %vm277, %v198, 0
        %v441 = vsel %vm277, %v199, 0
        %v444 = vsel %vm277, %v200, 0
        %v447 = vsel %vm277, %v201, 0
        %v450 = vsel %vm277, %v202, 0
        %v453 = vsel %vm277, %v203, 0
        %v456 = vsel %vm277, %v204, 0
        %v459 = vsel %vm277, %v205, 0
        %v462 = vsel %vm277, %v206, 0
        %v465 = vsel %vm277, %v207, 0
        %v468 = vsel %vm277, %v208, 0
        %v471 = vsel %vm277, %v209, 0
        %v474 = vsel %vm277, %v210, 0
        %v477 = vsel %vm277, %v211, 0
        %v480 = vsel %vm277, %v212, 0
        %v483 = vsel %vm277, %v213, 0
        %v486 = vsel %vm277, %v214, 0
        %v489 = vsel %vm277, %v215, 0
        %v492 = vsel %vm277, %v216, 0
        %v495 = vsel %vm277, %v217, 0
        %v498 = vsel %vm277, %v218, 0
        %v501 = vsel %vm277, %v219, 0
        %v504 = vsel %vm277, %v220, 0
        %v507 = vsel %vm277, %v221, 0
        %v510 = vsel %vm277, %v222, 0
        %v513 = vsel %vm277, %v223, 0
        %v516 = vsel %vm277, %v224, 0
        %v519 = vsel %vm277, %v225, 0
        %v522 = vsel %vm277, %v226, 0
        %v525 = vsel %vm277, %v227, 0
        %v528 = vsel %vm277, %v228, 0
        %v531 = vsel %vm277, %v229, 0
        %v534 = vsel %vm277, %v230, 0
        %v537 = vsel %vm277, %v231, 0
        %v540 = vsel %vm277, %v232, 0
        %v543 = vsel %vm277, %v233, 0
        %v546 = vsel %vm277, %v234, 0
        %v549 = vsel %vm277, %v235, 0
        %v552 = vsel %vm277, %v236, 0
        %v555 = vsel %vm277, %v237, 0
        %v558 = vsel %vm277, %v238, 0
        %v561 = vsel %vm277, %v239, 0
        %v564 = vsel %vm277, %v240, 0
        %v567 = vsel %vm277, %v241, 0
        %v570 = vsel %vm277, %v242, 0
        %v573 = vsel %vm277, %v243, 0
        %v576 = vsel %vm277, %v244, 0
        %v579 = vsel %vm277, %v245, 0
        %v582 = vsel %vm277, %v246, 0
        %v585 = vsel %vm277, %v247, 0
        %v588 = vsel %vm277, %v248, 0
        %v591 = vsel %vm277, %v249, 0
        %v594 = vsel %vm277, %v250, 0
        %v597 = vsel %vm277, %v251, 0
        %v600 = vsel %vm277, %v252, 0
        %v603 = vsel %vm277, %v253, 0
        %v606 = vsel %vm277, %v254, 0
        %v609 = vsel %vm277, %v255, 0
        %v612 = vsel %vm277, %v256, 0
        %v615 = vsel %vm277, %v257, 0
        %v618 = vsel %vm277, %v258, 0
        %v621 = vsel %vm277, %v259, 0
        %v624 = vsel %vm277, %v260, 0
        %v627 = vsel %vm277, %v261, 0
        %v630 = vsel %vm277, %v262, 0
        %v633 = vsel %vm277, %v263, 0
        %v636 = vsel %vm277, %v264, 0
        %v639 = vsel %vm277, %v265, 0
        %v642 = vsel %vm277, %v266, 0
        %v645 = vsel %vm277, %v267, 0
        %v648 = vsel %vm277, %v268, 0
        %v651 = vsel %vm277, %v269, 0
        %v654 = vsel %vm277, %v270, 0
        %v657 = vsel %vm277, %v271, 0
        %v660 = vsel %vm277, %v272, 0
        %v663 = vsel %vm277, %v273, 0
        %v666 = vsel %vm277, %v274, 0
        %v669 = vsel %vm277, %v275, 0
        %v672 = vsel %vm277, %v276, 0
        %674 = vmatprep.subr.mxu0 0.0
        %675 = vmatpush1.xpose.msra.mxu0 %v291
        %676 = vmatprep.subr.mxu0 0.0
        %677 = vmatpush1.xpose.msra.mxu0 %v294
        %678 = vmatprep.subr.mxu0 0.0
        %679 = vmatpush1.xpose.msra.mxu0 %v297
        %680 = vmatprep.subr.mxu0 0.0
        %681 = vmatpush1.xpose.msra.mxu0 %v300
        %682 = vmatprep.subr.mxu0 0.0
        %683 = vmatpush1.xpose.msra.mxu0 %v303
        %684 = vmatprep.subr.mxu0 0.0
        %685 = vmatpush1.xpose.msra.mxu0 %v306
        %686 = vmatprep.subr.mxu0 0.0
        %687 = vmatpush1.xpose.msra.mxu0 %v309
        %688 = vmatprep.subr.mxu0 0.0
        %689 = vmatpush1.xpose.msra.mxu0 %v312
        %690 = vmatprep.subr.mxu0 0.0
        %691 = vmatpush1.xpose.msra.mxu0 %v315
        %692 = vmatprep.subr.mxu0 0.0
        %693 = vmatpush1.xpose.msra.mxu0 %v318
        %694 = vmatprep.subr.mxu0 0.0
        %695 = vmatpush1.xpose.msra.mxu0 %v321
        %696 = vmatprep.subr.mxu0 0.0
        %697 = vmatpush1.xpose.msra.mxu0 %v324
        %698 = vmatprep.subr.mxu0 0.0
        %699 = vmatpush1.xpose.msra.mxu0 %v327
        %700 = vmatprep.subr.mxu0 0.0
        %701 = vmatpush1.xpose.msra.mxu0 %v330
        %702 = vmatprep.subr.mxu0 0.0
        %703 = vmatpush1.xpose.msra.mxu0 %v333
        %704 = vmatprep.subr.mxu0 0.0
        %705 = vmatpush1.xpose.msra.mxu0 %v336
        %706 = vmatprep.subr.mxu0 0.0
        %707 = vmatpush1.xpose.msra.mxu0 %v339
        %708 = vmatprep.subr.mxu0 0.0
        %709 = vmatpush1.xpose.msra.mxu0 %v342
        %710 = vmatprep.subr.mxu0 0.0
        %711 = vmatpush1.xpose.msra.mxu0 %v345
        %712 = vmatprep.subr.mxu0 0.0
        %713 = vmatpush1.xpose.msra.mxu0 %v348
        %714 = vmatprep.subr.mxu0 0.0
        %715 = vmatpush1.xpose.msra.mxu0 %v351
        %716 = vmatprep.subr.mxu0 0.0
        %717 = vmatpush1.xpose.msra.mxu0 %v354
        %718 = vmatprep.subr.mxu0 0.0
        %719 = vmatpush1.xpose.msra.mxu0 %v357
        %720 = vmatprep.subr.mxu0 0.0
        %721 = vmatpush1.xpose.msra.mxu0 %v360
        %722 = vmatprep.subr.mxu0 0.0
        %723 = vmatpush1.xpose.msra.mxu0 %v363
        %724 = vmatprep.subr.mxu0 0.0
        %725 = vmatpush1.xpose.msra.mxu0 %v366
        %726 = vmatprep.subr.mxu0 0.0
        %727 = vmatpush1.xpose.msra.mxu0 %v369
        %728 = vmatprep.subr.mxu0 0.0
        %729 = vmatpush1.xpose.msra.mxu0 %v372
        %730 = vmatprep.subr.mxu0 0.0
        %731 = vmatpush1.xpose.msra.mxu0 %v375
        %732 = vmatprep.subr.mxu0 0.0
        %733 = vmatpush1.xpose.msra.mxu0 %v378
        %734 = vmatprep.subr.mxu0 0.0
        %735 = vmatpush1.xpose.msra.mxu0 %v381
        %736 = vmatprep.subr.mxu0 0.0
        %737 = vmatpush1.xpose.msra.mxu0 %v384
        %738 = vmatprep.mubr.f32.mxu0 0.0
        %739 = vmatmul.mubr.f32.gmra.mrb[0].mxu0 %v279
        %v740 = vpop.f32.mrb[0].mxu0
        %v741 = vadd.f32 0.0, %v740
        %v742 = vpop.f32.mrb[0].mxu0
        %v743 = vadd.f32 0.0, %v742
        %744 = vmatprep.mubr.f32.mxu0 0.0
        %745 = vmatmul.mubr.f32.gmra.mrb[0].mxu0 %v282
        %v746 = vpop.f32.mrb[0].mxu0
        %v747 = vadd.f32 0.0, %v746
        %v748 = vpop.f32.mrb[0].mxu0
        %v749 = vadd.f32 0.0, %v748
        %750 = vmatprep.mubr.f32.mxu0 0.0
        %751 = vmatmul.mubr.f32.gmra.mrb[0].mxu0 %v285
        %v752 = vpop.f32.mrb[0].mxu0
        %v753 = vadd.f32 0.0, %v752
        %v754 = vpop.f32.mrb[0].mxu0
        %v755 = vadd.f32 0.0, %v754
        %756 = vmatprep.mubr.f32.mxu0 0.0
        %757 = vmatmul.mubr.f32.gmra.mrb[0].mxu0 %v288
        %v758 = vpop.f32.mrb[0].mxu0
        %v759 = vadd.f32 0.0, %v758
        %v760 = vpop.f32.mrb[0].mxu0
        %v761 = vadd.f32 0.0, %v760
        %762 = vdwg.mxu0
        %763 = vmatprep.subr.mxu0 0.0
        %764 = vmatpush1.xpose.msra.mxu0 %v387
        %765 = vmatprep.subr.mxu0 0.0
        %766 = vmatpush1.xpose.msra.mxu0 %v390
        %767 = vmatprep.subr.mxu0 0.0
        %768 = vmatpush1.xpose.msra.mxu0 %v393
        %769 = vmatprep.subr.mxu0 0.0
        %770 = vmatpush1.xpose.msra.mxu0 %v396
        %771 = vmatprep.subr.mxu0 0.0
        %772 = vmatpush1.xpose.msra.mxu0 %v399
        %773 = vmatprep.subr.mxu0 0.0
        %774 = vmatpush1.xpose.msra.mxu0 %v402
        %775 = vmatprep.subr.mxu0 0.0
        %776 = vmatpush1.xpose.msra.mxu0 %v405
        %777 = vmatprep.subr.mxu0 0.0
        %778 = vmatpush1.xpose.msra.mxu0 %v408
        %779 = vmatprep.subr.mxu0 0.0
        %780 = vmatpush1.xpose.msra.mxu0 %v411
        %781 = vmatprep.subr.mxu0 0.0
        %782 = vmatpush1.xpose.msra.mxu0 %v414
        %783 = vmatprep.subr.mxu0 0.0
        %784 = vmatpush1.xpose.msra.mxu0 %v417
        %785 = vmatprep.subr.mxu0 0.0
        %786 = vmatpush1.xpose.msra.mxu0 %v420
        %787 = vmatprep.subr.mxu0 0.0
        %788 = vmatpush1.xpose.msra.mxu0 %v423
        %789 = vmatprep.subr.mxu0 0.0
        %790 = vmatpush1.xpose.msra.mxu0 %v426
        %791 = vmatprep.subr.mxu0 0.0
        %792 = vmatpush1.xpose.msra.mxu0 %v429
        %793 = vmatprep.subr.mxu0 0.0
        %794 = vmatpush1.xpose.msra.mxu0 %v432
        %795 = vmatprep.subr.mxu0 0.0
        %796 = vmatpush1.xpose.msra.mxu0 %v435
        %797 = vmatprep.subr.mxu0 0.0
        %798 = vmatpush1.xpose.msra.mxu0 %v438
        %799 = vmatprep.subr.mxu0 0.0
        %800 = vmatpush1.xpose.msra.mxu0 %v441
        %801 = vmatprep.subr.mxu0 0.0
        %802 = vmatpush1.xpose.msra.mxu0 %v444
        %803 = vmatprep.subr.mxu0 0.0
        %804 = vmatpush1.xpose.msra.mxu0 %v447
        %805 = vmatprep.subr.mxu0 0.0
        %806 = vmatpush1.xpose.msra.mxu0 %v450
        %807 = vmatprep.subr.mxu0 0.0
        %808 = vmatpush1.xpose.msra.mxu0 %v453
        %809 = vmatprep.subr.mxu0 0.0
        %810 = vmatpush1.xpose.msra.mxu0 %v456
        %811 = vmatprep.subr.mxu0 0.0
        %812 = vmatpush1.xpose.msra.mxu0 %v459
        %813 = vmatprep.subr.mxu0 0.0
        %814 = vmatpush1.xpose.msra.mxu0 %v462
        %815 = vmatprep.subr.mxu0 0.0
        %816 = vmatpush1.xpose.msra.mxu0 %v465
        %817 = vmatprep.subr.mxu0 0.0
        %818 = vmatpush1.xpose.msra.mxu0 %v468
        %819 = vmatprep.subr.mxu0 0.0
        %820 = vmatpush1.xpose.msra.mxu0 %v471
        %821 = vmatprep.subr.mxu0 0.0
        %822 = vmatpush1.xpose.msra.mxu0 %v474
        %823 = vmatprep.subr.mxu0 0.0
        %824 = vmatpush1.xpose.msra.mxu0 %v477
        %825 = vmatprep.subr.mxu0 0.0
        %826 = vmatpush1.xpose.msra.mxu0 %v480
        %827 = vmatprep.mubr.f32.mxu0 0.0
        %828 = vmatmul.mubr.f32.gmra.mrb[0].mxu0 %v279
        %v829 = vpop.f32.mrb[0].mxu0
        %v830 = vadd.f32 0.0, %v829
        %v831 = vpop.f32.mrb[0].mxu0
        %v832 = vadd.f32 0.0, %v831
        %833 = vmatprep.mubr.f32.mxu0 0.0
        %834 = vmatmul.mubr.f32.gmra.mrb[0].mxu0 %v282
        %v835 = vpop.f32.mrb[0].mxu0
        %v836 = vadd.f32 0.0, %v835
        %v837 = vpop.f32.mrb[0].mxu0
        %v838 = vadd.f32 0.0, %v837
        %839 = vmatprep.mubr.f32.mxu0 0.0
        %840 = vmatmul.mubr.f32.gmra.mrb[0].mxu0 %v285
        %v841 = vpop.f32.mrb[0].mxu0
        %v842 = vadd.f32 0.0, %v841
        %v843 = vpop.f32.mrb[0].mxu0
        %v844 = vadd.f32 0.0, %v843
        %845 = vmatprep.mubr.f32.mxu0 0.0
        %846 = vmatmul.mubr.f32.gmra.mrb[0].mxu0 %v288
        %v847 = vpop.f32.mrb[0].mxu0
        %v848 = vadd.f32 0.0, %v847
        %v849 = vpop.f32.mrb[0].mxu0
        %v850 = vadd.f32 0.0, %v849
        %851 = vdwg.mxu0
        %852 = vmatprep.subr.mxu0 0.0
        %853 = vmatpush1.xpose.msra.mxu0 %v483
        %854 = vmatprep.subr.mxu0 0.0
        %855 = vmatpush1.xpose.msra.mxu0 %v486
        %856 = vmatprep.subr.mxu0 0.0
        %857 = vmatpush1.xpose.msra.mxu0 %v489
        %858 = vmatprep.subr.mxu0 0.0
        %859 = vmatpush1.xpose.msra.mxu0 %v492
        %860 = vmatprep.subr.mxu0 0.0
        %861 = vmatpush1.xpose.msra.mxu0 %v495
        %862 = vmatprep.subr.mxu0 0.0
        %863 = vmatpush1.xpose.msra.mxu0 %v498
        %864 = vmatprep.subr.mxu0 0.0
        %865 = vmatpush1.xpose.msra.mxu0 %v501
        %866 = vmatprep.subr.mxu0 0.0
        %867 = vmatpush1.xpose.msra.mxu0 %v504
        %868 = vmatprep.subr.mxu0 0.0
        %869 = vmatpush1.xpose.msra.mxu0 %v507
        %870 = vmatprep.subr.mxu0 0.0
        %871 = vmatpush1.xpose.msra.mxu0 %v510
        %872 = vmatprep.subr.mxu0 0.0
        %873 = vmatpush1.xpose.msra.mxu0 %v513
        %874 = vmatprep.subr.mxu0 0.0
        %875 = vmatpush1.xpose.msra.mxu0 %v516
        %876 = vmatprep.subr.mxu0 0.0
        %877 = vmatpush1.xpose.msra.mxu0 %v519
        %878 = vmatprep.subr.mxu0 0.0
        %879 = vmatpush1.xpose.msra.mxu0 %v522
        %880 = vmatprep.subr.mxu0 0.0
        %881 = vmatpush1.xpose.msra.mxu0 %v525
        %882 = vmatprep.subr.mxu0 0.0
        %883 = vmatpush1.xpose.msra.mxu0 %v528
        %884 = vmatprep.subr.mxu0 0.0
        %885 = vmatpush1.xpose.msra.mxu0 %v531
        %886 = vmatprep.subr.mxu0 0.0
        %887 = vmatpush1.xpose.msra.mxu0 %v534
        %888 = vmatprep.subr.mxu0 0.0
        %889 = vmatpush1.xpose.msra.mxu0 %v537
        %890 = vmatprep.subr.mxu0 0.0
        %891 = vmatpush1.xpose.msra.mxu0 %v540
        %892 = vmatprep.subr.mxu0 0.0
        %893 = vmatpush1.xpose.msra.mxu0 %v543
        %894 = vmatprep.subr.mxu0 0.0
        %895 = vmatpush1.xpose.msra.mxu0 %v546
        %896 = vmatprep.subr.mxu0 0.0
        %897 = vmatpush1.xpose.msra.mxu0 %v549
        %898 = vmatprep.subr.mxu0 0.0
        %899 = vmatpush1.xpose.msra.mxu0 %v552
        %900 = vmatprep.subr.mxu0 0.0
        %901 = vmatpush1.xpose.msra.mxu0 %v555
        %902 = vmatprep.subr.mxu0 0.0
        %903 = vmatpush1.xpose.msra.mxu0 %v558
        %904 = vmatprep.subr.mxu0 0.0
        %905 = vmatpush1.xpose.msra.mxu0 %v561
        %906 = vmatprep.subr.mxu0 0.0
        %907 = vmatpush1.xpose.msra.mxu0 %v564
        %908 = vmatprep.subr.mxu0 0.0
        %909 = vmatpush1.xpose.msra.mxu0 %v567
        %910 = vmatprep.subr.mxu0 0.0
        %911 = vmatpush1.xpose.msra.mxu0 %v570
        %912 = vmatprep.subr.mxu0 0.0
        %913 = vmatpush1.xpose.msra.mxu0 %v573
        %914 = vmatprep.subr.mxu0 0.0
        %915 = vmatpush1.xpose.msra.mxu0 %v576
        %916 = vmatprep.mubr.f32.mxu0 0.0
        %917 = vmatmul.mubr.f32.gmra.mrb[0].mxu0 %v279
        %v918 = vpop.f32.mrb[0].mxu0
        %v919 = vadd.f32 0.0, %v918
        %v920 = vpop.f32.mrb[0].mxu0
        %v921 = vadd.f32 0.0, %v920
        %922 = vmatprep.mubr.f32.mxu0 0.0
        %923 = vmatmul.mubr.f32.gmra.mrb[0].mxu0 %v282
        %v924 = vpop.f32.mrb[0].mxu0
        %v925 = vadd.f32 0.0, %v924
        %v926 = vpop.f32.mrb[0].mxu0
        %v927 = vadd.f32 0.0, %v926
        %928 = vmatprep.mubr.f32.mxu0 0.0
        %929 = vmatmul.mubr.f32.gmra.mrb[0].mxu0 %v285
        %v930 = vpop.f32.mrb[0].mxu0
        %v931 = vadd.f32 0.0, %v930
        %v932 = vpop.f32.mrb[0].mxu0
        %v933 = vadd.f32 0.0, %v932
        %934 = vmatprep.mubr.f32.mxu0 0.0
        %935 = vmatmul.mubr.f32.gmra.mrb[0].mxu0 %v288
        %v936 = vpop.f32.mrb[0].mxu0
        %v937 = vadd.f32 0.0, %v936
        %v938 = vpop.f32.mrb[0].mxu0
        %v939 = vadd.f32 0.0, %v938
        %940 = vdwg.mxu0
        %941 = vmatprep.subr.mxu0 0.0
        %942 = vmatpush1.xpose.msra.mxu0 %v579
        %943 = vmatprep.subr.mxu0 0.0
        %944 = vmatpush1.xpose.msra.mxu0 %v582
        %945 = vmatprep.subr.mxu0 0.0
        %946 = vmatpush1.xpose.msra.mxu0 %v585
        %947 = vmatprep.subr.mxu0 0.0
        %948 = vmatpush1.xpose.msra.mxu0 %v588
        %949 = vmatprep.subr.mxu0 0.0
        %950 = vmatpush1.xpose.msra.mxu0 %v591
        %951 = vmatprep.subr.mxu0 0.0
        %952 = vmatpush1.xpose.msra.mxu0 %v594
        %953 = vmatprep.subr.mxu0 0.0
        %954 = vmatpush1.xpose.msra.mxu0 %v597
        %955 = vmatprep.subr.mxu0 0.0
        %956 = vmatpush1.xpose.msra.mxu0 %v600
        %957 = vmatprep.subr.mxu0 0.0
        %958 = vmatpush1.xpose.msra.mxu0 %v603
        %959 = vmatprep.subr.mxu0 0.0
        %960 = vmatpush1.xpose.msra.mxu0 %v606
        %961 = vmatprep.subr.mxu0 0.0
        %962 = vmatpush1.xpose.msra.mxu0 %v609
        %963 = vmatprep.subr.mxu0 0.0
        %964 = vmatpush1.xpose.msra.mxu0 %v612
        %965 = vmatprep.subr.mxu0 0.0
        %966 = vmatpush1.xpose.msra.mxu0 %v615
        %967 = vmatprep.subr.mxu0 0.0
        %968 = vmatpush1.xpose.msra.mxu0 %v618
        %969 = vmatprep.subr.mxu0 0.0
        %970 = vmatpush1.xpose.msra.mxu0 %v621
        %971 = vmatprep.subr.mxu0 0.0
        %972 = vmatpush1.xpose.msra.mxu0 %v624
        %973 = vmatprep.subr.mxu0 0.0
        %974 = vmatpush1.xpose.msra.mxu0 %v627
        %975 = vmatprep.subr.mxu0 0.0
        %976 = vmatpush1.xpose.msra.mxu0 %v630
        %977 = vmatprep.subr.mxu0 0.0
        %978 = vmatpush1.xpose.msra.mxu0 %v633
        %979 = vmatprep.subr.mxu0 0.0
        %980 = vmatpush1.xpose.msra.mxu0 %v636
        %981 = vmatprep.subr.mxu0 0.0
        %982 = vmatpush1.xpose.msra.mxu0 %v639
        %983 = vmatprep.subr.mxu0 0.0
        %984 = vmatpush1.xpose.msra.mxu0 %v642
        %985 = vmatprep.subr.mxu0 0.0
        %986 = vmatpush1.xpose.msra.mxu0 %v645
        %987 = vmatprep.subr.mxu0 0.0
        %988 = vmatpush1.xpose.msra.mxu0 %v648
        %989 = vmatprep.subr.mxu0 0.0
        %990 = vmatpush1.xpose.msra.mxu0 %v651
        %991 = vmatprep.subr.mxu0 0.0
        %992 = vmatpush1.xpose.msra.mxu0 %v654
        %993 = vmatprep.subr.mxu0 0.0
        %994 = vmatpush1.xpose.msra.mxu0 %v657
        %995 = vmatprep.subr.mxu0 0.0
        %996 = vmatpush1.xpose.msra.mxu0 %v660
        %997 = vmatprep.subr.mxu0 0.0
        %998 = vmatpush1.xpose.msra.mxu0 %v663
        %999 = vmatprep.subr.mxu0 0.0
        %1000 = vmatpush1.xpose.msra.mxu0 %v666
        %1001 = vmatprep.subr.mxu0 0.0
        %1002 = vmatpush1.xpose.msra.mxu0 %v669
        %1003 = vmatprep.subr.mxu0 0.0
        %1004 = vmatpush1.xpose.msra.mxu0 %v672
        %1005 = vmatprep.mubr.f32.mxu0 0.0
        %1006 = vmatmul.mubr.f32.gmra.mrb[0].mxu0 %v279
        %v1007 = vpop.f32.mrb[0].mxu0
        %v1008 = vadd.f32 0.0, %v1007
        %v1009 = vpop.f32.mrb[0].mxu0
        %v1010 = vadd.f32 0.0, %v1009
        %1011 = vmatprep.mubr.f32.mxu0 0.0
        %1012 = vmatmul.mubr.f32.gmra.mrb[0].mxu0 %v282
        %v1013 = vpop.f32.mrb[0].mxu0
        %v1014 = vadd.f32 0.0, %v1013
        %v1015 = vpop.f32.mrb[0].mxu0
        %v1016 = vadd.f32 0.0, %v1015
        %1017 = vmatprep.mubr.f32.mxu0 0.0
        %1018 = vmatmul.mubr.f32.gmra.mrb[0].mxu0 %v285
        %v1019 = vpop.f32.mrb[0].mxu0
        %v1020 = vadd.f32 0.0, %v1019
        %v1021 = vpop.f32.mrb[0].mxu0
        %v1022 = vadd.f32 0.0, %v1021
        %1023 = vmatprep.mubr.f32.mxu0 0.0
        %1024 = vmatmul.mubr.f32.gmra.mrb[0].mxu0 %v288
        %v1025 = vpop.f32.mrb[0].mxu0
        %v1026 = vadd.f32 0.0, %v1025
        %v1027 = vpop.f32.mrb[0].mxu0
        %v1028 = vadd.f32 0.0, %v1027
        %1029 = vdwg.mxu0
        %1030 = vst [vmem:[%s137] sm:$0xff] %v741
        %1031 = vst [vmem:[%s137 + $0x8] sm:$0xff] %v743
        %1032 = vst [vmem:[%s137 + $0x10] sm:$0xff] %v830
        %1033 = vst [vmem:[%s137 + $0x18] sm:$0xff] %v832
        %1034 = vst [vmem:[%s137 + $0x20] sm:$0xff] %v919
        %1035 = vst [vmem:[%s137 + $0x28] sm:$0xff] %v921
        %1036 = vst [vmem:[%s137 + $0x30] sm:$0xff] %v1008
        %1037 = vst [vmem:[%s137 + $0x38] sm:$0xff] %v1010
        %1038 = vst [vmem:[%s137 + $0x40] sm:$0xff] %v747
        %1039 = vst [vmem:[%s137 + $0x48] sm:$0xff] %v749
        %1040 = vst [vmem:[%s137 + $0x50] sm:$0xff] %v836
        %1041 = vst [vmem:[%s137 + $0x58] sm:$0xff] %v838
        %1042 = vst [vmem:[%s137 + $0x60] sm:$0xff] %v925
        %1043 = vst [vmem:[%s137 + $0x68] sm:$0xff] %v927
        %1044 = vst [vmem:[%s137 + $0x70] sm:$0xff] %v1014
        %1045 = vst [vmem:[%s137 + $0x78] sm:$0xff] %v1016
        %1046 = vst [vmem:[%s137 + $0x80] sm:$0xff] %v753
        %1047 = vst [vmem:[%s137 + $0x88] sm:$0xff] %v755
        %1048 = vst [vmem:[%s137 + $0x90] sm:$0xff] %v842
        %1049 = vst [vmem:[%s137 + $0x98] sm:$0xff] %v844
        %1050 = vst [vmem:[%s137 + $0xa0] sm:$0xff] %v931
        %1051 = vst [vmem:[%s137 + $0xa8] sm:$0xff] %v933
        %1052 = vst [vmem:[%s137 + $0xb0] sm:$0xff] %v1020
        %1053 = vst [vmem:[%s137 + $0xb8] sm:$0xff] %v1022
        %1054 = vst [vmem:[%s137 + $0xc0] sm:$0xff] %v759
        %1055 = vst [vmem:[%s137 + $0xc8] sm:$0xff] %v761
        %1056 = vst [vmem:[%s137 + $0xd0] sm:$0xff] %v848
        %1057 = vst [vmem:[%s137 + $0xd8] sm:$0xff] %v850
        %1058 = vst [vmem:[%s137 + $0xe0] sm:$0xff] %v937
        %1059 = vst [vmem:[%s137 + $0xe8] sm:$0xff] %v939
        %1060 = vst [vmem:[%s137 + $0xf0] sm:$0xff] %v1026
        %1061 = vst [vmem:[%s137 + $0xf8] sm:$0xff] %v1028
        %s1062 = sand.u32 %s71, 1
        %s1063 = scalar_lea.sflag [#allocation3], %s1062
        %s1064 = sand.u32 %s71, 1
        %s1065 = smul.addr %s1064, 256
        %s1066 = scalar_lea.vmem [#allocation2], %s1065
        // Predicated region
        $region29: #{tpu_custom_call.1} parent=27 // pred_check
          %p1067 = pneg %p81
        $region30: #{tpu_custom_call.1} parent=27 // pred_check_branch
          %1069 = sbr.rel (%p1067) target = $region32
        $region31: #{tpu_custom_call.1} parent=27 // pred_region
          %s1070 = smul.u32 8, %s16
          %s1072 = ssub.s32 4096, 4096
          %1073 = vsyncadd %s1063, %s1072
          %s1074 = smul.addr %s1070, 128
          %s1075 = scalar_lea.hbm %s2, %s1074
          %s1076 = sshll.u32 %s1066, 4
          %s1077 = int_to_ptr.vmem [resolvable:$true] %s1076
          %1082 = dma.vmem_to_hbm [thread:$0]  %s1077, 4096, %s1075, %s1063, 1024, 2048, 64
        $region32: #{tpu_custom_call.1} parent=27 // pred_fallthru
          _
      $region28: #{tpu_custom_call.1} parent=5 // pred_fallthru
        _
      %p1083 = scmp.le.s32.totalorder 2, %s11
      // Predicated region
      $region33: #{tpu_custom_call.1} parent=5 // pred_check
        %p1084 = pneg %p1083
      $region34: #{tpu_custom_call.1} parent=5 // pred_check_branch
        %1086 = sbr.rel (%p1084) target = $region36
      $region35: #{tpu_custom_call.1} parent=5 // pred_region
        %s1087 = ssub.s32 %s11, 2
        // Predicated region
        $region37: #{tpu_custom_call.1} parent=35 // pred_check
          %p1088 = pneg %p87
        $region38: #{tpu_custom_call.1} parent=35 // pred_check_branch
          %1090 = sbr.rel (%p1088) target = $region40
        $region39: #{tpu_custom_call.1} parent=35 // pred_region
          %s1091 = sand.u32 %s72, 1
          %s1092 = scalar_lea.sflag [#allocation3], %s1091
          %s1093 = sand.u32 %s72, 1
          %s1094 = smul.addr %s1093, 256
          %s1095 = scalar_lea.vmem [#allocation2], %s1094
          %1096 = dma.done %s1092, 4096
        $region40: #{tpu_custom_call.1} parent=35 // pred_fallthru
          _
      $region36: #{tpu_custom_call.1} parent=5 // pred_fallthru
        _
    $region6: #{tpu_custom_call.1} parent=1 // loop_footer
      %s15 = sadd.s32 1, %s11
    $region7: #{tpu_custom_call.1} parent=1 // loop_footer_branch
      %10 = sbr.rel target = $region3
    $region8: #{tpu_custom_call.1} parent=1 // loop_exit
      _
    %1097 = vsyncpa [#allocation3], 1
    %s1098 = scalar_lea.sflag [#allocation3], 1
    %1099 = vsyncpa %s1098, 1

</llo_original>
